<compile_context>
chip_gen: v7x
topology: tpu7x:2x2x1
jax: 0.10.0
libtpu: 0.0.40
codegen_flags: <defaults>
</compile_context>

<pallas_src>
import functools
import math

import jax
import jax.numpy as jnp
from jax.experimental import pallas as pl
from jax.experimental.pallas import tpu as pltpu


# --------------------------------------------------------------------------
# Kernel 1: fused Q|K and V projections, emitted head-major bf16 (once/batch)
# --------------------------------------------------------------------------
def _qkv_proj_kernel(src_ref, pos_ref, wqk_ref, wv_ref, bqk_ref, bv_ref,
                     qh_ref, kh_ref, vh_ref, *, nhead: int):
    x = src_ref[0].astype(jnp.float32)        # (S, E)
    p = pos_ref[0].astype(jnp.float32)        # (S, E)
    S, E = x.shape
    H = nhead
    hd = E // H

    qk_in = (x + p).astype(jnp.bfloat16)      # q = k = src + pos
    x_b = x.astype(jnp.bfloat16)              # value path uses src only

    # fused Q|K projection; 1/sqrt(hd) already folded into wq / bq by wrapper.
    qk = jnp.dot(qk_in, wqk_ref[...], preferred_element_type=jnp.float32) + bqk_ref[...]
    v = jnp.dot(x_b, wv_ref[...], preferred_element_type=jnp.float32) + bv_ref[...]

    def to_heads(m):                          # (S, E) -> (H, S, hd), once per batch
        return jnp.transpose(m.reshape(S, H, hd), (1, 0, 2))

    qh_ref[0] = to_heads(qk[:, :E]).astype(jnp.bfloat16)
    kh_ref[0] = to_heads(qk[:, E:]).astype(jnp.bfloat16)
    vh_ref[0] = to_heads(v).astype(jnp.bfloat16)


# --------------------------------------------------------------------------
# Kernel 2: attention (query-tiled) + out-proj + LN1 + FFN + LN2
# --------------------------------------------------------------------------
def _attn_ffn_kernel(qh_ref, kh_ref, vh_ref, src_ref,
                     wo_ref, w1_ref, w2_ref, b1_ref, vecs_ref,
                     out_ref, *, nhead: int):
    qh = qh_ref[0]                            # (H, Tq, hd) bf16 (pre-scaled)
    kh = kh_ref[0]                            # (H, S,  hd) bf16
    vh = vh_ref[0]                            # (H, S,  hd) bf16
    x = src_ref[0].astype(jnp.float32)        # (Tq, E) residual input
    Tq, E = x.shape
    H = nhead

    vecs = vecs_ref[...]                      # (6, E) f32 packed small vectors
    bo = vecs[0:1, :]
    b2 = vecs[1:2, :]
    ln1w = vecs[2:3, :]
    ln1b = vecs[3:4, :]
    ln2w = vecs[4:5, :]
    ln2b = vecs[5:6, :]

    # ---- attention for this query tile only: scores bounded to (H, Tq, S) ----
    # TODO(synk): for sequences where the full (H,S,hd) K/V no longer fit VMEM,
    # add a KV-tile inner loop with online softmax (flash) over pl.ANY K/V refs.
    s = jnp.einsum("hqd,hkd->hqk", qh, kh,
                   preferred_element_type=jnp.float32)          # (H, Tq, S) f32
    s = s - jnp.max(s, axis=-1, keepdims=True)
    e = jnp.exp(s)
    inv = pl.reciprocal(jnp.sum(e, axis=-1, keepdims=True), approx=True)
    p = (e * inv).astype(jnp.bfloat16)

    o = jnp.einsum("hqk,hkd->hqd", p, vh,
                   preferred_element_type=jnp.float32)          # (H, Tq, hd)
    ob = o.astype(jnp.bfloat16)

    # head-merge folded into the Wo contraction (no (H,Tq,hd)->(Tq,E) transpose)
    attn = jnp.zeros((Tq, E), jnp.float32)
    for h in range(H):                                          # H is small & static
        attn = attn + jnp.dot(ob[h], wo_ref[h],
                              preferred_element_type=jnp.float32)

    # ---- residual + LayerNorm1 (dropout1 identity in eval mode) ----
    x1 = x + attn + bo
    mu = jnp.mean(x1, axis=-1, keepdims=True)
    var = jnp.mean((x1 - mu) ** 2, axis=-1, keepdims=True)
    x1 = (x1 - mu) * jax.lax.rsqrt(var + 1e-5) * ln1w + ln1b

    # ---- feed-forward: linear2(relu(linear1(x)))  (dropout identity) ----
    h1 = jnp.dot(x1.astype(jnp.bfloat16), w1_ref[...],
                 preferred_element_type=jnp.float32) + b1_ref[...]
    h1 = jnp.maximum(h1, 0.0)
    ff = jnp.dot(h1.astype(jnp.bfloat16), w2_ref[...],
                 preferred_element_type=jnp.float32) + b2

    # ---- residual + LayerNorm2 (dropout2 identity) ----
    x2 = x1 + ff
    mu = jnp.mean(x2, axis=-1, keepdims=True)
    var = jnp.mean((x2 - mu) ** 2, axis=-1, keepdims=True)
    x2 = (x2 - mu) * jax.lax.rsqrt(var + 1e-5) * ln2w + ln2b

    out_ref[0] = x2.astype(out_ref.dtype)


# --------------------------------------------------------------------------
# Wrapper
# --------------------------------------------------------------------------
def _pick_q_tile(S):
    if S <= 256:
        return S
    for t in (256, 128, 64, 32, 16, 8):
        if S % t == 0:
            return t
    return S


def _vmem_limit(required_bytes):
    """Per-chip VMEM budget: leave compiler/relayout scratch headroom."""
    try:
        cap = int(pltpu.get_tpu_info().vmem_capacity_bytes)
    except Exception:
        cap = 64 << 20                       # conservative fallback (v7x physical)
    upper = max(32 << 20, int(cap * 0.82))   # ~52 MiB on v7x, ~105 MiB on v5e/v6e
    return int(min(max(int(required_bytes), 32 << 20), upper))


def _const_spec(arr, grid_rank):
    """Grid-resident weight/bias: constant index map, single-buffered."""
    zeros = (0,) * arr.ndim
    if grid_rank == 1:
        imap = lambda b, _z=zeros: _z
    else:
        imap = lambda b, q, _z=zeros: _z
    return pl.BlockSpec(arr.shape, imap, pipeline_mode=pl.Buffered(1))


def transformer_encoder_layer(src, pos, params, *, nhead):
    """src, pos: (S, B, E) float32 — PyTorch (seq, batch, embed) convention."""
    S, B, E = src.shape
    assert E % nhead == 0, "d_model must be divisible by nhead"
    F = params["w1"].shape[0]
    hd = E // nhead
    H = nhead
    scale = 1.0 / math.sqrt(hd)

    wq, wk, wv = jnp.split(params["in_proj_weight"], 3, axis=0)   # each (E, E)
    bq, bk, bv = jnp.split(params["in_proj_bias"], 3, axis=0)     # each (E,)

    # fused (pre-scaled) Q|K projection; matmul weights shipped bf16
    wqk = jnp.concatenate([wq.T * scale, wk.T], axis=1).astype(jnp.bfloat16)   # (E, 2E)
    bqk = jnp.concatenate([bq * scale, bk], axis=0).reshape(1, 2 * E)          # (1, 2E)
    wv_t = wv.T.astype(jnp.bfloat16)                                           # (E, E)
    bv_r = bv.reshape(1, E)                                                    # (1, E)

    # Wo head-major so the head merge folds into the contraction
    wo_hde = params["out_proj_w"].T.reshape(H, hd, E).astype(jnp.bfloat16)     # (H, hd, E)
    w1_t = params["w1"].T.astype(jnp.bfloat16)                                 # (E, F)
    w2_t = params["w2"].T.astype(jnp.bfloat16)                                 # (F, E)
    b1_r = params["b1"].reshape(1, F)                                          # (1, F)
    # pack the six (E,)-sized vectors into one array (one DMA descriptor)
    vecs = jnp.stack([params["out_proj_b"], params["b2"],
                      params["ln1_w"], params["ln1_b"],
                      params["ln2_w"], params["ln2_b"]], axis=0)               # (6, E)

    src_bse = jnp.transpose(src, (1, 0, 2))   # (B, S, E)
    pos_bse = jnp.transpose(pos, (1, 0, 2))

    # ---------------- kernel 1: Q/K/V projection (once per sequence) ----------
    proj_required = int(1.25 * (
        2 * 2 * (S * E * 4)                  # src, pos (double-buffered)
        + 2 * 3 * (S * E * 2)                # qh/kh/vh outputs (bf16, double-buffered)
        + (2 * E * E + E * E) * 2            # wqk + wv (bf16, single-buffered)
        + (2 * E + E) * 4                    # bqk + bv
        + (S * 2 * E + S * E) * 4            # qk, v f32 intermediates
        + (S * 2 * E + S * E) * 2            # head-split relayout temps (bf16)
        + 2 * (S * E * 2)))                  # bf16 operand copies

    qkv_weights = [wqk, wv_t, bqk, bv_r]
    qh, kh, vh = pl.pallas_call(
        functools.partial(_qkv_proj_kernel, nhead=H),
        out_shape=(jax.ShapeDtypeStruct((B, H, S, hd), jnp.bfloat16),
                   jax.ShapeDtypeStruct((B, H, S, hd), jnp.bfloat16),
                   jax.ShapeDtypeStruct((B, H, S, hd), jnp.bfloat16)),
        grid=(B,),
        in_specs=[pl.BlockSpec((1, S, E), lambda b: (b, 0, 0)),
                  pl.BlockSpec((1, S, E), lambda b: (b, 0, 0))]
                 + [_const_spec(w, 1) for w in qkv_weights],
        out_specs=(pl.BlockSpec((1, H, S, hd), lambda b: (b, 0, 0, 0)),
                   pl.BlockSpec((1, H, S, hd), lambda b: (b, 0, 0, 0)),
                   pl.BlockSpec((1, H, S, hd), lambda b: (b, 0, 0, 0))),
        compiler_params=pltpu.CompilerParams(
            dimension_semantics=("parallel",),
            vmem_limit_bytes=_vmem_limit(proj_required)),
    )(src_bse, pos_bse, *qkv_weights)

    # ---------------- kernel 2: attention (query-tiled) + FFN + LNs -----------
    Tq = _pick_q_tile(S)
    nQ = S // Tq

    attn_required = int(1.25 * (
        2 * (Tq * E * 2)                     # q tile (bf16, double-buffered)
        + 2 * 2 * (S * E * 2)                # full K, V (bf16, double-buffered)
        + 2 * (Tq * E * 4)                   # src tile (f32)
        + 2 * (Tq * E * 4)                   # out tile (f32)
        + (E * E + E * F + F * E) * 2        # wo, w1, w2 (bf16, single-buffered)
        + (F + 6 * E) * 4                    # b1, packed vectors
        + H * Tq * S * (4 + 4 + 2)           # scores f32, exp f32, probs bf16
        + Tq * E * 4 * 6                     # o/attn/x1/x2/residual temps
        + Tq * F * (4 + 2)))                 # ffn hidden f32 + bf16 copy

    main_weights = [wo_hde, w1_t, w2_t, b1_r, vecs]
    out = pl.pallas_call(
        functools.partial(_attn_ffn_kernel, nhead=H),
        out_shape=jax.ShapeDtypeStruct((B, S, E), src.dtype),
        grid=(B, nQ),
        in_specs=[
            pl.BlockSpec((1, H, Tq, hd), lambda b, q: (b, 0, q, 0)),   # Q tile
            pl.BlockSpec((1, H, S, hd), lambda b, q: (b, 0, 0, 0)),    # K (per batch)
            pl.BlockSpec((1, H, S, hd), lambda b, q: (b, 0, 0, 0)),    # V (per batch)
            pl.BlockSpec((1, Tq, E), lambda b, q: (b, q, 0)),          # residual src tile
        ] + [_const_spec(w, 2) for w in main_weights],
        out_specs=pl.BlockSpec((1, Tq, E), lambda b, q: (b, q, 0)),
        compiler_params=pltpu.CompilerParams(
            dimension_semantics=("parallel", "parallel"),  # feeds both v7x TCs at B=1
            vmem_limit_bytes=_vmem_limit(attn_required)),
    )(qh, kh, vh, src_bse, *main_weights)

    return jnp.transpose(out, (1, 0, 2))      # back to (S, B, E)


# --------------------------------------------------------------------------
# Pure-JAX f32 reference (mirrors torch forward_post in eval mode)
# --------------------------------------------------------------------------
def _reference(src, pos, params, *, nhead):
    S, B, E = src.shape
    hd = E // nhead
    wq, wk, wv = jnp.split(params["in_proj_weight"], 3, axis=0)
    bq, bk, bv = jnp.split(params["in_proj_bias"], 3, axis=0)

    qk_in = src + pos
    q = jnp.einsum("sbe,fe->sbf", qk_in, wq) + bq
    k = jnp.einsum("sbe,fe->sbf", qk_in, wk) + bk
    v = jnp.einsum("sbe,fe->sbf", src, wv) + bv

    def heads(x):  # (S,B,E) -> (B,H,S,hd)
        return jnp.transpose(x.reshape(S, B, nhead, hd), (1, 2, 0, 3))

    qh, kh, vh = heads(q) / math.sqrt(hd), heads(k), heads(v)
    s = jnp.einsum("bhqd,bhkd->bhqk", qh, kh)
    a = jax.nn.softmax(s, axis=-1)
    o = jnp.einsum("bhqk,bhkd->bhqd", a, vh)
    o = jnp.transpose(o, (2, 0, 1, 3)).reshape(S, B, E)
    attn = jnp.einsum("sbe,fe->sbf", o, params["out_proj_w"]) + params["out_proj_b"]

    def ln(x, w, b):
        mu = jnp.mean(x, -1, keepdims=True)
        var = jnp.mean((x - mu) ** 2, -1, keepdims=True)
        return (x - mu) * jax.lax.rsqrt(var + 1e-5) * w + b

    x = ln(src + attn, params["ln1_w"], params["ln1_b"])
    h1 = jax.nn.relu(jnp.einsum("sbe,fe->sbf", x, params["w1"]) + params["b1"])
    ff = jnp.einsum("sbf,ef->sbe", h1, params["w2"]) + params["b2"]
    return ln(x + ff, params["ln2_w"], params["ln2_b"])


if __name__ == "__main__":
    S, B, E, H, FF = 8, 2, 32, 4, 64

    key = jax.random.PRNGKey(0)
    ks = jax.random.split(key, 12)
    params = {
        "in_proj_weight": jax.random.normal(ks[0], (3 * E, E), jnp.float32) * 0.1,
        "in_proj_bias":   jax.random.normal(ks[1], (3 * E,),   jnp.float32) * 0.1,
        "out_proj_w":     jax.random.normal(ks[2], (E, E),     jnp.float32) * 0.1,
        "out_proj_b":     jax.random.normal(ks[3], (E,),       jnp.float32) * 0.1,
        "w1":             jax.random.normal(ks[4], (FF, E),    jnp.float32) * 0.1,
        "b1":             jax.random.normal(ks[5], (FF,),      jnp.float32) * 0.1,
        "w2":             jax.random.normal(ks[6], (E, FF),    jnp.float32) * 0.1,
        "b2":             jax.random.normal(ks[7], (E,),       jnp.float32) * 0.1,
        "ln1_w": jnp.ones((E,), jnp.float32),
        "ln1_b": jnp.zeros((E,), jnp.float32),
        "ln2_w": jnp.ones((E,), jnp.float32),
        "ln2_b": jnp.zeros((E,), jnp.float32),
    }

    src = jax.random.normal(ks[8], (S, B, E), jnp.float32)
    pos = jax.random.normal(ks[9], (S, B, E), jnp.float32)

    out = transformer_encoder_layer(src, pos, params, nhead=H)
    out = jax.block_until_ready(out)

    ref = _reference(src, pos, params, nhead=H)
    assert out.shape == (S, B, E)
    # bf16 MXU operands / approx reciprocal -> looser tolerance than pure f32
    assert jnp.allclose(out, ref, atol=5e-2, rtol=5e-2), "mismatch vs reference"

    # TODO(synk): attn_mask / src_key_padding_mask not supported (unused by this
    # forward path); training-mode stochastic dropout not implemented (eval identity).
    print("KERNEL_OK")
</pallas_src>

<mosaic_0001>
module attributes {stable_mosaic.version = 11 : i64} {
  func.func @_qkv_proj_kernel(%arg0: i32, %arg1: memref<1x8x32xf32, #tpu.memory_space<vmem>>, %arg2: memref<1x8x32xf32, #tpu.memory_space<vmem>>, %arg3: memref<32x64xbf16, #tpu.memory_space<vmem>>, %arg4: memref<32x32xbf16, #tpu.memory_space<vmem>>, %arg5: memref<1x64xf32, #tpu.memory_space<vmem>>, %arg6: memref<1x32xf32, #tpu.memory_space<vmem>>, %arg7: memref<1x4x8x8xbf16, #tpu.memory_space<vmem>>, %arg8: memref<1x4x8x8xbf16, #tpu.memory_space<vmem>>, %arg9: memref<1x4x8x8xbf16, #tpu.memory_space<vmem>>) attributes {dimension_semantics = [#tpu.dimension_semantics<parallel>], iteration_bounds = array<i64: 2>, scalar_prefetch = 0 : i64, scratch_operands = 0 : i64, tpu.core_type = #tpu.core_type<tc>, window_params = [{transform_indices = @transform_0, window_bounds = array<i64: 1, 8, 32>}, {transform_indices = @transform_1, window_bounds = array<i64: 1, 8, 32>}, {pipeline_mode = #tpu.pipeline_mode<synchronous>, transform_indices = @transform_2, window_bounds = array<i64: 32, 64>}, {pipeline_mode = #tpu.pipeline_mode<synchronous>, transform_indices = @transform_3, window_bounds = array<i64: 32, 32>}, {pipeline_mode = #tpu.pipeline_mode<synchronous>, transform_indices = @transform_4, window_bounds = array<i64: 1, 64>}, {pipeline_mode = #tpu.pipeline_mode<synchronous>, transform_indices = @transform_5, window_bounds = array<i64: 1, 32>}, {transform_indices = @transform_6, window_bounds = array<i64: 1, 4, 8, 8>}, {transform_indices = @transform_7, window_bounds = array<i64: 1, 4, 8, 8>}, {transform_indices = @transform_8, window_bounds = array<i64: 1, 4, 8, 8>}]} {
    %c0 = arith.constant 0 : index
    %c0_0 = arith.constant 0 : index
    %c0_1 = arith.constant 0 : index
    %0 = vector.load %arg1[%c0, %c0_0, %c0_1] : memref<1x8x32xf32, #tpu.memory_space<vmem>>, vector<1x8x32xf32>
    %1 = vector.shape_cast %0 : vector<1x8x32xf32> to vector<8x32xf32>
    %c0_2 = arith.constant 0 : index
    %c0_3 = arith.constant 0 : index
    %c0_4 = arith.constant 0 : index
    %2 = vector.load %arg2[%c0_2, %c0_3, %c0_4] : memref<1x8x32xf32, #tpu.memory_space<vmem>>, vector<1x8x32xf32>
    %3 = vector.shape_cast %2 : vector<1x8x32xf32> to vector<8x32xf32>
    %4 = arith.addf %1, %3 : vector<8x32xf32>
    %5 = arith.truncf %4 : vector<8x32xf32> to vector<8x32xbf16>
    %6 = arith.truncf %1 : vector<8x32xf32> to vector<8x32xbf16>
    %c0_5 = arith.constant 0 : index
    %c0_6 = arith.constant 0 : index
    %7 = vector.load %arg3[%c0_5, %c0_6] : memref<32x64xbf16, #tpu.memory_space<vmem>>, vector<32x64xbf16>
    %cst = arith.constant dense<0.000000e+00> : vector<8x64xf32>
    %8 = tpu.matmul %5, %7, %cst {dimension_numbers = #tpu.dot_dimension_numbers<[1], [0], [0], [1], [0, 0, 1, 1], [], []>} : vector<8x32xbf16>, vector<32x64xbf16>, vector<8x64xf32> -> vector<8x64xf32>
    %c0_7 = arith.constant 0 : index
    %c0_8 = arith.constant 0 : index
    %9 = vector.load %arg5[%c0_7, %c0_8] : memref<1x64xf32, #tpu.memory_space<vmem>>, vector<1x64xf32>
    %10 = vector.broadcast %9 : vector<1x64xf32> to vector<8x64xf32>
    %11 = arith.addf %8, %10 : vector<8x64xf32>
    %c0_9 = arith.constant 0 : index
    %c0_10 = arith.constant 0 : index
    %12 = vector.load %arg4[%c0_9, %c0_10] : memref<32x32xbf16, #tpu.memory_space<vmem>>, vector<32x32xbf16>
    %cst_11 = arith.constant dense<0.000000e+00> : vector<8x32xf32>
    %13 = tpu.matmul %6, %12, %cst_11 {dimension_numbers = #tpu.dot_dimension_numbers<[1], [0], [0], [1], [0, 0, 1, 1], [], []>} : vector<8x32xbf16>, vector<32x32xbf16>, vector<8x32xf32> -> vector<8x32xf32>
    %c0_12 = arith.constant 0 : index
    %c0_13 = arith.constant 0 : index
    %14 = vector.load %arg6[%c0_12, %c0_13] : memref<1x32xf32, #tpu.memory_space<vmem>>, vector<1x32xf32>
    %15 = vector.broadcast %14 : vector<1x32xf32> to vector<8x32xf32>
    %16 = arith.addf %13, %15 : vector<8x32xf32>
    %17 = vector.extract_strided_slice %11 {offsets = [0, 0], sizes = [8, 32], strides = [1, 1]} : vector<8x64xf32> to vector<8x32xf32>
    %18 = vector.shape_cast %17 : vector<8x32xf32> to vector<8x4x8xf32>
    %19 = tpu.transpose %18, [1, 0, 2] : vector<8x4x8xf32> -> vector<4x8x8xf32>
    %20 = arith.truncf %19 : vector<4x8x8xf32> to vector<4x8x8xbf16>
    %c0_14 = arith.constant 0 : index
    %c0_15 = arith.constant 0 : index
    %c0_16 = arith.constant 0 : index
    %c0_17 = arith.constant 0 : index
    %21 = vector.load %arg7[%c0_14, %c0_15, %c0_16, %c0_17] : memref<1x4x8x8xbf16, #tpu.memory_space<vmem>>, vector<1x4x8x8xbf16>
    %22 = vector.shape_cast %21 : vector<1x4x8x8xbf16> to vector<4x8x8xbf16>
    %23 = vector.shape_cast %20 : vector<4x8x8xbf16> to vector<1x4x8x8xbf16>
    tpu.vector_store %arg7[%c0_14, %c0_15, %c0_16, %c0_17], %23 {strides = array<i32>} : memref<1x4x8x8xbf16, #tpu.memory_space<vmem>>, vector<1x4x8x8xbf16>,
    %24 = vector.extract_strided_slice %11 {offsets = [0, 32], sizes = [8, 32], strides = [1, 1]} : vector<8x64xf32> to vector<8x32xf32>
    %25 = vector.shape_cast %24 : vector<8x32xf32> to vector<8x4x8xf32>
    %26 = tpu.transpose %25, [1, 0, 2] : vector<8x4x8xf32> -> vector<4x8x8xf32>
    %27 = arith.truncf %26 : vector<4x8x8xf32> to vector<4x8x8xbf16>
    %c0_18 = arith.constant 0 : index
    %c0_19 = arith.constant 0 : index
    %c0_20 = arith.constant 0 : index
    %c0_21 = arith.constant 0 : index
    %28 = vector.load %arg8[%c0_18, %c0_19, %c0_20, %c0_21] : memref<1x4x8x8xbf16, #tpu.memory_space<vmem>>, vector<1x4x8x8xbf16>
    %29 = vector.shape_cast %28 : vector<1x4x8x8xbf16> to vector<4x8x8xbf16>
    %30 = vector.shape_cast %27 : vector<4x8x8xbf16> to vector<1x4x8x8xbf16>
    tpu.vector_store %arg8[%c0_18, %c0_19, %c0_20, %c0_21], %30 {strides = array<i32>} : memref<1x4x8x8xbf16, #tpu.memory_space<vmem>>, vector<1x4x8x8xbf16>,
    %31 = vector.shape_cast %16 : vector<8x32xf32> to vector<8x4x8xf32>
    %32 = tpu.transpose %31, [1, 0, 2] : vector<8x4x8xf32> -> vector<4x8x8xf32>
    %33 = arith.truncf %32 : vector<4x8x8xf32> to vector<4x8x8xbf16>
    %c0_22 = arith.constant 0 : index
    %c0_23 = arith.constant 0 : index
    %c0_24 = arith.constant 0 : index
    %c0_25 = arith.constant 0 : index
    %34 = vector.load %arg9[%c0_22, %c0_23, %c0_24, %c0_25] : memref<1x4x8x8xbf16, #tpu.memory_space<vmem>>, vector<1x4x8x8xbf16>
    %35 = vector.shape_cast %34 : vector<1x4x8x8xbf16> to vector<4x8x8xbf16>
    %36 = vector.shape_cast %33 : vector<4x8x8xbf16> to vector<1x4x8x8xbf16>
    tpu.vector_store %arg9[%c0_22, %c0_23, %c0_24, %c0_25], %36 {strides = array<i32>} : memref<1x4x8x8xbf16, #tpu.memory_space<vmem>>, vector<1x4x8x8xbf16>,
    return
  }
  func.func @transform_0(%arg0: i32) -> (i32, i32, i32) {
    %c0_i32 = arith.constant 0 : i32
    %c0_i32_0 = arith.constant 0 : i32
    %c0_i32_1 = arith.constant 0 : i32
    return %arg0, %c0_i32, %c0_i32_0 : i32, i32, i32
  }
  func.func @transform_1(%arg0: i32) -> (i32, i32, i32) {
    %c0_i32 = arith.constant 0 : i32
    %c0_i32_0 = arith.constant 0 : i32
    %c0_i32_1 = arith.constant 0 : i32
    return %arg0, %c0_i32, %c0_i32_0 : i32, i32, i32
  }
  func.func @transform_2(%arg0: i32) -> (i32, i32) {
    %c0_i32 = arith.constant 0 : i32
    %c0_i32_0 = arith.constant 0 : i32
    %c0_i32_1 = arith.constant 0 : i32
    return %c0_i32, %c0_i32_0 : i32, i32
  }
  func.func @transform_3(%arg0: i32) -> (i32, i32) {
    %c0_i32 = arith.constant 0 : i32
    %c0_i32_0 = arith.constant 0 : i32
    %c0_i32_1 = arith.constant 0 : i32
    return %c0_i32, %c0_i32_0 : i32, i32
  }
  func.func @transform_4(%arg0: i32) -> (i32, i32) {
    %c0_i32 = arith.constant 0 : i32
    %c0_i32_0 = arith.constant 0 : i32
    %c0_i32_1 = arith.constant 0 : i32
    return %c0_i32, %c0_i32_0 : i32, i32
  }
  func.func @transform_5(%arg0: i32) -> (i32, i32) {
    %c0_i32 = arith.constant 0 : i32
    %c0_i32_0 = arith.constant 0 : i32
    %c0_i32_1 = arith.constant 0 : i32
    return %c0_i32, %c0_i32_0 : i32, i32
  }
  func.func @transform_6(%arg0: i32) -> (i32, i32, i32, i32) {
    %c0_i32 = arith.constant 0 : i32
    %c0_i32_0 = arith.constant 0 : i32
    %c0_i32_1 = arith.constant 0 : i32
    %c0_i32_2 = arith.constant 0 : i32
    return %arg0, %c0_i32, %c0_i32_0, %c0_i32_1 : i32, i32, i32, i32
  }
  func.func @transform_7(%arg0: i32) -> (i32, i32, i32, i32) {
    %c0_i32 = arith.constant 0 : i32
    %c0_i32_0 = arith.constant 0 : i32
    %c0_i32_1 = arith.constant 0 : i32
    %c0_i32_2 = arith.constant 0 : i32
    return %arg0, %c0_i32, %c0_i32_0, %c0_i32_1 : i32, i32, i32, i32
  }
  func.func @transform_8(%arg0: i32) -> (i32, i32, i32, i32) {
    %c0_i32 = arith.constant 0 : i32
    %c0_i32_0 = arith.constant 0 : i32
    %c0_i32_1 = arith.constant 0 : i32
    %c0_i32_2 = arith.constant 0 : i32
    return %arg0, %c0_i32, %c0_i32_0, %c0_i32_1 : i32, i32, i32, i32
  }
}

</mosaic_0001>

<llo_original>
// kernel: tpu_custom_call.1
$region0: #{tpu_custom_call.1}
  #allocation0 [shape = 'u32[]', space=smem, size = 0x4, offset = 0x4, fixed_abs, tag = 'smem constant byte address 0x4 - core index']
  #allocation1 [shape = 'u32[144,128]{1,0:T(1,128)}', space=vmem, size = 0x12000, scoped, tag = 'internal scratch']
  %s0 = inlined_call_operand.hbm [shape: f32[2,8,32], index: 0, kind: input, shape index: {}]
  %s1 = inlined_call_operand.hbm [shape: f32[2,8,32], index: 1, kind: input, shape index: {}]
  %s2 = inlined_call_operand.hbm [shape: bf16[32,64], index: 2, kind: input, shape index: {}]
  %s3 = inlined_call_operand.hbm [shape: bf16[32,32], index: 3, kind: input, shape index: {}]
  %s4 = inlined_call_operand.vmem [shape: f32[1,64], index: 4, kind: input, shape index: {}]
  %s5 = inlined_call_operand.vmem [shape: f32[1,32], index: 5, kind: input, shape index: {}]
  %s6 = inlined_call_operand.hbm [shape: bf16[2,4,8,8], index: 6, kind: output, shape index: {0}]
  %s7 = inlined_call_operand.hbm [shape: bf16[2,4,8,8], index: 7, kind: output, shape index: {1}]
  %s8 = inlined_call_operand.hbm [shape: bf16[2,4,8,8], index: 8, kind: output, shape index: {2}]
  %9 = xla_tuple %s6, %s7, %s8
  %s10 = sld [smem:[#allocation0]]
  $region89: #{tpu_custom_call.1} parent=0
    _
  %s12 = ssub.s32 1, %s10
  %s13 = scalar_select 0, %s12, %s10
  $region1: #{tpu_custom_call.1} parent=0
    #allocation2 [shape = 'u8[8192]{0}', space=vmem, size = 0x2000, scoped, tag = 'input window, operand 0']
    #allocation3 [shape = 's32[2]{0}', space=sflag, size = 0x8, scoped, tag = 'scoped memory for tpu_custom_call.1']
    #allocation4 [shape = 's32[2]{0}', space=sflag, size = 0x8, scoped, tag = 'scoped memory for tpu_custom_call.1']
    #allocation5 [shape = 'u8[8192]{0}', space=vmem, size = 0x2000, scoped, tag = 'input window, operand 1']
    #allocation6 [shape = 's32[2]{0}', space=sflag, size = 0x8, scoped, tag = 'scoped memory for tpu_custom_call.1']
    #allocation7 [shape = 'u8[8192]{0}', space=vmem, size = 0x2000, scoped, tag = 'input window, operand 2, single buffered']
    #allocation8 [shape = 'u8[8192]{0}', space=vmem, size = 0x2000, scoped, tag = 'input window, operand 3, single buffered']
    #allocation9 [shape = 's32[1]{0}', space=sflag, size = 0x4, scoped, tag = 'scoped memory for tpu_custom_call.1']
    #allocation10 [shape = 'u8[16384]{0}', space=vmem, size = 0x4000, scoped, tag = 'output window, operand 0']
    #allocation11 [shape = 'u8[16384]{0}', space=vmem, size = 0x4000, scoped, tag = 'output window, operand 1']
    #allocation12 [shape = 's32[2]{0}', space=sflag, size = 0x8, scoped, tag = 'scoped memory for tpu_custom_call.1']
    #allocation13 [shape = 'u8[16384]{0}', space=vmem, size = 0x4000, scoped, tag = 'output window, operand 2']
    %14 = vsyncpa [#allocation3], 0
    %s15 = scalar_lea.sflag [#allocation3], 1
    %16 = vsyncpa %s15, 0
    %17 = vsyncpa [#allocation6], 0
    %s18 = scalar_lea.sflag [#allocation6], 1
    %19 = vsyncpa %s18, 0
    %20 = vsyncpa [#allocation9], 0
    %21 = vsyncpa [#allocation4], 0
    %s22 = scalar_lea.sflag [#allocation4], 1
    %23 = vsyncpa %s22, 0
    %24 = vsyncpa [#allocation12], 0
    %s25 = scalar_lea.sflag [#allocation12], 1
    %26 = vsyncpa %s25, 0
    loop: start=0, step=1, limit=4
    $region2: #{tpu_custom_call.1} parent=1 // loop_pre_header
      _
    $region3: #{tpu_custom_call.1} parent=1 // loop_header
      %s28 = sphi 0, %s32
      %p29 = scmp.ge.s32.totalorder %s28, 4
      %s38 = sphi 0, %s40
      %s41 = sphi 0, %s38
      %s42 = sphi 0, %s41
      %s58 = sphi 0, %s42
      %s64 = sphi 0, %s66
      %s67 = sphi 0, %s64
      %s68 = sphi 0, %s67
      %s84 = sphi 0, %s68
      %s88 = sphi 0, %s88
      %s90 = sphi 0, %s88
      %s91 = sphi 0, %s90
      %s105 = sphi 0, %s91
      %s109 = sphi 0, %s109
      %s111 = sphi 0, %s109
      %s112 = sphi 0, %s111
      %s126 = sphi 0, %s112
      %s130 = sphi 0, %s130
      %s132 = sphi 0, %s130
      %s133 = sphi 0, %s132
      %s147 = sphi 0, %s133
      %s151 = sphi 0, %s151
      %s153 = sphi 0, %s151
      %s154 = sphi 0, %s153
      %s168 = sphi 0, %s154
      %s174 = sphi 0, %s176
      %s177 = sphi 0, %s174
      %s178 = sphi 0, %s177
      %s194 = sphi 0, %s178
      %s200 = sphi 0, %s202
      %s203 = sphi 0, %s200
      %s204 = sphi 0, %s203
      %s220 = sphi 0, %s204
      %s226 = sphi 0, %s228
      %s229 = sphi 0, %s226
      %s230 = sphi 0, %s229
      %s246 = sphi 0, %s230
    $region4: #{tpu_custom_call.1} parent=1 // loop_header_branch
      %31 = sbr.rel (%p29) target = $region8
    $region5: #{tpu_custom_call.1} parent=1 // loop_body
      %s33 = ssub.s32 %s28, 1
      %s34 = ssub.s32 %s28, 2
      %s35 = sadd.s32 %s28, 1
      %s36 = ssub.s32 %s28, %s35
      %p37 = scmp.eq.s32.totalorder %s36, 0
      %s39 = sadd.s32 %s38, 1
      %s40 = scalar_select %p37, %s38, %s39
      %p43 = pneg %p37
      %p44 = scmp.eq.s32.totalorder %s28, 1
      %p45 = por %p43, %p44
      %p46 = scmp.ne.s32.totalorder %s38, %s41
      %p47 = scmp.eq.s32.totalorder %s28, 0
      %p48 = por %p46, %p47
      %p49 = scmp.ne.s32.totalorder %s38, %s41
      %p50 = scmp.eq.s32.totalorder %s33, 1
      %p51 = por %p49, %p50
      %p52 = scmp.ne.s32.totalorder %s41, %s42
      %p53 = scmp.eq.s32.totalorder %s33, 0
      %p54 = por %p52, %p53
      %p55 = scmp.ne.s32.totalorder %s41, %s42
      %p56 = scmp.eq.s32.totalorder %s34, 1
      %p57 = por %p55, %p56
      %p59 = scmp.ne.s32.totalorder %s42, %s58
      %p60 = scmp.eq.s32.totalorder %s34, 0
      %p61 = por %p59, %p60
      %s62 = ssub.s32 %s28, %s35
      %p63 = scmp.eq.s32.totalorder %s62, 0
      %s65 = sadd.s32 %s64, 1
      %s66 = scalar_select %p63, %s64, %s65
      %p69 = pneg %p63
      %p70 = scmp.eq.s32.totalorder %s28, 1
      %p71 = por %p69, %p70
      %p72 = scmp.ne.s32.totalorder %s64, %s67
      %p73 = scmp.eq.s32.totalorder %s28, 0
      %p74 = por %p72, %p73
      %p75 = scmp.ne.s32.totalorder %s64, %s67
      %p76 = scmp.eq.s32.totalorder %s33, 1
      %p77 = por %p75, %p76
      %p78 = scmp.ne.s32.totalorder %s67, %s68
      %p79 = scmp.eq.s32.totalorder %s33, 0
      %p80 = por %p78, %p79
      %p81 = scmp.ne.s32.totalorder %s67, %s68
      %p82 = scmp.eq.s32.totalorder %s34, 1
      %p83 = por %p81, %p82
      %p85 = scmp.ne.s32.totalorder %s68, %s84
      %p86 = scmp.eq.s32.totalorder %s34, 0
      %p87 = por %p85, %p86
      %s89 = sadd.s32 %s88, 1
      %p92 = scmp.eq.s32.totalorder %s28, 1
      %p93 = scmp.ne.s32.totalorder %s88, %s90
      %p94 = scmp.eq.s32.totalorder %s28, 0
      %p95 = por %p93, %p94
      %p96 = scmp.ne.s32.totalorder %s88, %s90
      %p97 = scmp.eq.s32.totalorder %s33, 1
      %p98 = por %p96, %p97
      %p99 = scmp.ne.s32.totalorder %s90, %s91
      %p100 = scmp.eq.s32.totalorder %s33, 0
      %p101 = por %p99, %p100
      %p102 = scmp.ne.s32.totalorder %s90, %s91
      %p103 = scmp.eq.s32.totalorder %s34, 1
      %p104 = por %p102, %p103
      %p106 = scmp.ne.s32.totalorder %s91, %s105
      %p107 = scmp.eq.s32.totalorder %s34, 0
      %p108 = por %p106, %p107
      %s110 = sadd.s32 %s109, 1
      %p113 = scmp.eq.s32.totalorder %s28, 1
      %p114 = scmp.ne.s32.totalorder %s109, %s111
      %p115 = scmp.eq.s32.totalorder %s28, 0
      %p116 = por %p114, %p115
      %p117 = scmp.ne.s32.totalorder %s109, %s111
      %p118 = scmp.eq.s32.totalorder %s33, 1
      %p119 = por %p117, %p118
      %p120 = scmp.ne.s32.totalorder %s111, %s112
      %p121 = scmp.eq.s32.totalorder %s33, 0
      %p122 = por %p120, %p121
      %p123 = scmp.ne.s32.totalorder %s111, %s112
      %p124 = scmp.eq.s32.totalorder %s34, 1
      %p125 = por %p123, %p124
      %p127 = scmp.ne.s32.totalorder %s112, %s126
      %p128 = scmp.eq.s32.totalorder %s34, 0
      %p129 = por %p127, %p128
      %s131 = sadd.s32 %s130, 1
      %p134 = scmp.eq.s32.totalorder %s28, 1
      %p135 = scmp.ne.s32.totalorder %s130, %s132
      %p136 = scmp.eq.s32.totalorder %s28, 0
      %p137 = por %p135, %p136
      %p138 = scmp.ne.s32.totalorder %s130, %s132
      %p139 = scmp.eq.s32.totalorder %s33, 1
      %p140 = por %p138, %p139
      %p141 = scmp.ne.s32.totalorder %s132, %s133
      %p142 = scmp.eq.s32.totalorder %s33, 0
      %p143 = por %p141, %p142
      %p144 = scmp.ne.s32.totalorder %s132, %s133
      %p145 = scmp.eq.s32.totalorder %s34, 1
      %p146 = por %p144, %p145
      %p148 = scmp.ne.s32.totalorder %s133, %s147
      %p149 = scmp.eq.s32.totalorder %s34, 0
      %p150 = por %p148, %p149
      %s152 = sadd.s32 %s151, 1
      %p155 = scmp.eq.s32.totalorder %s28, 1
      %p156 = scmp.ne.s32.totalorder %s151, %s153
      %p157 = scmp.eq.s32.totalorder %s28, 0
      %p158 = por %p156, %p157
      %p159 = scmp.ne.s32.totalorder %s151, %s153
      %p160 = scmp.eq.s32.totalorder %s33, 1
      %p161 = por %p159, %p160
      %p162 = scmp.ne.s32.totalorder %s153, %s154
      %p163 = scmp.eq.s32.totalorder %s33, 0
      %p164 = por %p162, %p163
      %p165 = scmp.ne.s32.totalorder %s153, %s154
      %p166 = scmp.eq.s32.totalorder %s34, 1
      %p167 = por %p165, %p166
      %p169 = scmp.ne.s32.totalorder %s154, %s168
      %p170 = scmp.eq.s32.totalorder %s34, 0
      %p171 = por %p169, %p170
      %s172 = ssub.s32 %s28, %s35
      %p173 = scmp.eq.s32.totalorder %s172, 0
      %s175 = sadd.s32 %s174, 1
      %s176 = scalar_select %p173, %s174, %s175
      %p179 = pneg %p173
      %p180 = scmp.eq.s32.totalorder %s28, 1
      %p181 = por %p179, %p180
      %p182 = scmp.ne.s32.totalorder %s174, %s177
      %p183 = scmp.eq.s32.totalorder %s28, 0
      %p184 = por %p182, %p183
      %p185 = scmp.ne.s32.totalorder %s174, %s177
      %p186 = scmp.eq.s32.totalorder %s33, 1
      %p187 = por %p185, %p186
      %p188 = scmp.ne.s32.totalorder %s177, %s178
      %p189 = scmp.eq.s32.totalorder %s33, 0
      %p190 = por %p188, %p189
      %p191 = scmp.ne.s32.totalorder %s177, %s178
      %p192 = scmp.eq.s32.totalorder %s34, 1
      %p193 = por %p191, %p192
      %p195 = scmp.ne.s32.totalorder %s178, %s194
      %p196 = scmp.eq.s32.totalorder %s34, 0
      %p197 = por %p195, %p196
      %s198 = ssub.s32 %s28, %s35
      %p199 = scmp.eq.s32.totalorder %s198, 0
      %s201 = sadd.s32 %s200, 1
      %s202 = scalar_select %p199, %s200, %s201
      %p205 = pneg %p199
      %p206 = scmp.eq.s32.totalorder %s28, 1
      %p207 = por %p205, %p206
      %p208 = scmp.ne.s32.totalorder %s200, %s203
      %p209 = scmp.eq.s32.totalorder %s28, 0
      %p210 = por %p208, %p209
      %p211 = scmp.ne.s32.totalorder %s200, %s203
      %p212 = scmp.eq.s32.totalorder %s33, 1
      %p213 = por %p211, %p212
      %p214 = scmp.ne.s32.totalorder %s203, %s204
      %p215 = scmp.eq.s32.totalorder %s33, 0
      %p216 = por %p214, %p215
      %p217 = scmp.ne.s32.totalorder %s203, %s204
      %p218 = scmp.eq.s32.totalorder %s34, 1
      %p219 = por %p217, %p218
      %p221 = scmp.ne.s32.totalorder %s204, %s220
      %p222 = scmp.eq.s32.totalorder %s34, 0
      %p223 = por %p221, %p222
      %s224 = ssub.s32 %s28, %s35
      %p225 = scmp.eq.s32.totalorder %s224, 0
      %s227 = sadd.s32 %s226, 1
      %s228 = scalar_select %p225, %s226, %s227
      %p231 = pneg %p225
      %p232 = scmp.eq.s32.totalorder %s28, 1
      %p233 = por %p231, %p232
      %p234 = scmp.ne.s32.totalorder %s226, %s229
      %p235 = scmp.eq.s32.totalorder %s28, 0
      %p236 = por %p234, %p235
      %p237 = scmp.ne.s32.totalorder %s226, %s229
      %p238 = scmp.eq.s32.totalorder %s33, 1
      %p239 = por %p237, %p238
      %p240 = scmp.ne.s32.totalorder %s229, %s230
      %p241 = scmp.eq.s32.totalorder %s33, 0
      %p242 = por %p240, %p241
      %p243 = scmp.ne.s32.totalorder %s229, %s230
      %p244 = scmp.eq.s32.totalorder %s34, 1
      %p245 = por %p243, %p244
      %p247 = scmp.ne.s32.totalorder %s230, %s246
      %p248 = scmp.eq.s32.totalorder %s34, 0
      %p249 = por %p247, %p248
      %p250 = scmp.le.s32.totalorder 1, %s28
      %p251 = scmp.lt.s32.totalorder %s28, 3
      %p252 = pnand %p250, %p251
      %p253 = pneg %p252
      // Predicated region
      $region9: #{tpu_custom_call.1} parent=5 // pred_check
        _
      $region10: #{tpu_custom_call.1} parent=5 // pred_check_branch
        %255 = sbr.rel (%p252) target = $region12
      $region11: #{tpu_custom_call.1} parent=5 // pred_region
        %s256 = ssub.s32 %s28, 1
        // Predicated region
        $region13: #{tpu_custom_call.1} parent=11 // pred_check
          %p257 = pneg %p101
        $region14: #{tpu_custom_call.1} parent=11 // pred_check_branch
          %259 = sbr.rel (%p257) target = $region16
        $region15: #{tpu_custom_call.1} parent=11 // pred_region
          %s261 = ssub.s32 256, 256
          %262 = vsyncadd [#allocation6], %s261
          %s263 = sshll.u32 [#allocation7], 4
          %s264 = int_to_ptr.vmem [resolvable:$true] %s263
          %269 = dma.hbm_to_vmem [thread:$0]  %s2, 256, %s264, [#allocation6], 64, 64, 4
        $region16: #{tpu_custom_call.1} parent=11 // pred_fallthru
          _
        // Predicated region
        $region17: #{tpu_custom_call.1} parent=11 // pred_check
          %p270 = pneg %p122
        $region18: #{tpu_custom_call.1} parent=11 // pred_check_branch
          %272 = sbr.rel (%p270) target = $region20
        $region19: #{tpu_custom_call.1} parent=11 // pred_region
          %s274 = ssub.s32 256, 256
          %275 = vsyncadd [#allocation9], %s274
          %s276 = sshll.u32 [#allocation8], 4
          %s277 = int_to_ptr.vmem [resolvable:$true] %s276
          %282 = dma.hbm_to_vmem [thread:$0]  %s3, 256, %s277, [#allocation9], 64, 64, 4
        $region20: #{tpu_custom_call.1} parent=11 // pred_fallthru
          _
        // Predicated region
        $region21: #{tpu_custom_call.1} parent=11 // pred_check
          %p283 = pneg %p143
        $region22: #{tpu_custom_call.1} parent=11 // pred_check_branch
          %285 = sbr.rel (%p283) target = $region24
        $region23: #{tpu_custom_call.1} parent=11 // pred_region
          _
        $region24: #{tpu_custom_call.1} parent=11 // pred_fallthru
          _
        // Predicated region
        $region25: #{tpu_custom_call.1} parent=11 // pred_check
          %p286 = pneg %p164
        $region26: #{tpu_custom_call.1} parent=11 // pred_check_branch
          %288 = sbr.rel (%p286) target = $region28
        $region27: #{tpu_custom_call.1} parent=11 // pred_region
          _
        $region28: #{tpu_custom_call.1} parent=11 // pred_fallthru
          _
      $region12: #{tpu_custom_call.1} parent=5 // pred_fallthru
        _
      %p289 = scmp.lt.s32.totalorder %s28, 2
      // Predicated region
      $region29: #{tpu_custom_call.1} parent=5 // pred_check
        %p290 = pneg %p289
      $region30: #{tpu_custom_call.1} parent=5 // pred_check_branch
        %292 = sbr.rel (%p290) target = $region32
      $region31: #{tpu_custom_call.1} parent=5 // pred_region
        // Predicated region
        $region33: #{tpu_custom_call.1} parent=31 // pred_check
          %p293 = pneg %p48
        $region34: #{tpu_custom_call.1} parent=31 // pred_check_branch
          %295 = sbr.rel (%p293) target = $region36
        $region35: #{tpu_custom_call.1} parent=31 // pred_region
          %s296 = sand.u32 %s38, 1
          %s297 = scalar_lea.sflag [#allocation3], %s296
          %s298 = sand.u32 %s38, 1
          %s299 = smul.addr %s298, 8
          %s300 = scalar_lea.vmem [#allocation2], %s299
          %s302 = ssub.s32 128, 128
          %303 = vsyncadd %s297, %s302
          %s304 = smul.addr %s28, 128
          %s305 = scalar_lea.hbm %s0, %s304
          %s307 = sshll.u32 %s300, 4
          %s308 = int_to_ptr.vmem [resolvable:$true] %s307
          %310 = dma.hbm_to_vmem [thread:$0]  %s305, 128, %s308, %s297
        $region36: #{tpu_custom_call.1} parent=31 // pred_fallthru
          _
        // Predicated region
        $region37: #{tpu_custom_call.1} parent=31 // pred_check
          %p311 = pneg %p74
        $region38: #{tpu_custom_call.1} parent=31 // pred_check_branch
          %313 = sbr.rel (%p311) target = $region40
        $region39: #{tpu_custom_call.1} parent=31 // pred_region
          %s314 = sand.u32 %s28, 1
          %s315 = scalar_lea.sflag [#allocation6], %s314
          %s316 = sand.u32 %s64, 1
          %s317 = smul.addr %s316, 8
          %s318 = scalar_lea.vmem [#allocation5], %s317
          %s320 = ssub.s32 128, 128
          %321 = vsyncadd %s315, %s320
          %s322 = smul.addr %s28, 128
          %s323 = scalar_lea.hbm %s1, %s322
          %s325 = sshll.u32 %s318, 4
          %s326 = int_to_ptr.vmem [resolvable:$true] %s325
          %328 = dma.hbm_to_vmem [thread:$0]  %s323, 128, %s326, %s315
        $region40: #{tpu_custom_call.1} parent=31 // pred_fallthru
          _
      $region32: #{tpu_custom_call.1} parent=5 // pred_fallthru
        _
      %p329 = scmp.le.s32.totalorder 1, %s28
      %p330 = scmp.lt.s32.totalorder %s28, 3
      %p331 = pnand %p329, %p330
      %p332 = pneg %p331
      // Predicated region
      $region41: #{tpu_custom_call.1} parent=5 // pred_check
        _
      $region42: #{tpu_custom_call.1} parent=5 // pred_check_branch
        %334 = sbr.rel (%p331) target = $region44
      $region43: #{tpu_custom_call.1} parent=5 // pred_region
        %s335 = ssub.s32 %s28, 1
        %s336 = sand.u32 %s41, 1
        %s337 = scalar_lea.sflag [#allocation3], %s336
        %s338 = sand.u32 %s41, 1
        %s339 = smul.addr %s338, 8
        %s340 = scalar_lea.vmem [#allocation2], %s339
        // Predicated region
        $region45: #{tpu_custom_call.1} parent=43 // pred_check
          %p341 = pneg %p54
        $region46: #{tpu_custom_call.1} parent=43 // pred_check_branch
          %343 = sbr.rel (%p341) target = $region48
        $region47: #{tpu_custom_call.1} parent=43 // pred_region
          %344 = dma.done %s337, 128
        $region48: #{tpu_custom_call.1} parent=43 // pred_fallthru
          _
        %s345 = sand.u32 %s33, 1
        %s346 = scalar_lea.sflag [#allocation6], %s345
        %s347 = sand.u32 %s67, 1
        %s348 = smul.addr %s347, 8
        %s349 = scalar_lea.vmem [#allocation5], %s348
        // Predicated region
        $region49: #{tpu_custom_call.1} parent=43 // pred_check
          %p350 = pneg %p80
        $region50: #{tpu_custom_call.1} parent=43 // pred_check_branch
          %352 = sbr.rel (%p350) target = $region52
        $region51: #{tpu_custom_call.1} parent=43 // pred_region
          %353 = dma.done %s346, 128
        $region52: #{tpu_custom_call.1} parent=43 // pred_fallthru
          _
        // Predicated region
        $region53: #{tpu_custom_call.1} parent=43 // pred_check
          %p354 = pneg %p101
        $region54: #{tpu_custom_call.1} parent=43 // pred_check_branch
          %356 = sbr.rel (%p354) target = $region56
        $region55: #{tpu_custom_call.1} parent=43 // pred_region
          %357 = dma.done [#allocation6], 256
        $region56: #{tpu_custom_call.1} parent=43 // pred_fallthru
          _
        // Predicated region
        $region57: #{tpu_custom_call.1} parent=43 // pred_check
          %p358 = pneg %p122
        $region58: #{tpu_custom_call.1} parent=43 // pred_check_branch
          %360 = sbr.rel (%p358) target = $region60
        $region59: #{tpu_custom_call.1} parent=43 // pred_region
          %361 = dma.done [#allocation9], 256
        $region60: #{tpu_custom_call.1} parent=43 // pred_fallthru
          _
        %s362 = sand.u32 %s41, 1
        %s363 = scalar_lea.sflag [#allocation3], %s362
        %s364 = sand.u32 %s41, 1
        %s365 = smul.addr %s364, 8
        %s366 = scalar_lea.vmem [#allocation2], %s365
        %p367 = pneg %p54
        %p368 = pneg %p51
        %s369 = sand.u32 %s33, 1
        %s370 = scalar_lea.sflag [#allocation6], %s369
        %s371 = sand.u32 %s67, 1
        %s372 = smul.addr %s371, 8
        %s373 = scalar_lea.vmem [#allocation5], %s372
        %p374 = pneg %p80
        %p375 = pneg %p77
        %p376 = pneg %p101
        %p377 = pneg %p98
        %p378 = pneg %p122
        %p379 = pneg %p119
        %p380 = pneg %p143
        %p381 = pneg %p140
        %p382 = pneg %p164
        %p383 = pneg %p161
        %p384 = pneg %p190
        %p385 = pneg %p187
        %s386 = sand.u32 %s177, 1
        %s387 = scalar_lea.sflag [#allocation4], %s386
        %s388 = sand.u32 %s177, 1
        %s389 = smul.addr %s388, 16
        %s390 = scalar_lea.vmem [#allocation10], %s389
        %p391 = pneg %p216
        %p392 = pneg %p213
        %s393 = sand.u32 %s33, 1
        %s394 = scalar_lea.sflag [#allocation12], %s393
        %s395 = sand.u32 %s203, 1
        %s396 = smul.addr %s395, 16
        %s397 = scalar_lea.vmem [#allocation11], %s396
        %p398 = pneg %p242
        %p399 = pneg %p239
        %s400 = sand.u32 %s33, 1
        %s401 = scalar_lea.sflag [#allocation12], %s400
        %s402 = sand.u32 %s229, 1
        %s403 = smul.addr %s402, 16
        %s404 = scalar_lea.vmem [#allocation13], %s403
        %v406 = vld [vmem:[%s340] sm:$0xff]
        %v407 = vld [vmem:[%s349] sm:$0xff]
        %v408 = vadd.f32 %v406, %v407
        %v409 = vpack.c.bf16 %v408, %v408
        %v410 = vpack.c.bf16 %v406, %v406
        %v411 = vld [vmem:[#allocation7] sm:$0xf]
        %v412 = vld [vmem:[#allocation7 + $0x4] sm:$0xf]
        %v413 = vld [vmem:[#allocation7 + $0x8] sm:$0xf]
        %v414 = vld [vmem:[#allocation7 + $0xc] sm:$0xf]
        %v415 = vld [vmem:[%s4] sm:$0x1]
        %v417 = vlaneseq
        %v418 = vshrl.u32 %v417, 7
        %v419 = vsub.s32 0, %v418
        %v420 = vrot.slane %v415, %v419
        %v426 = vunpack.c.l.b16 %v411
        %v427 = vunpack.c.l.b16 %v412
        %v428 = vunpack.c.l.b16 %v413
        %v429 = vunpack.c.l.b16 %v414
        %v430 = vpack.c.b16 %v427, %v426
        %v431 = vpack.c.b16 %v429, %v428
        %vm434 = vcmask 261120
        %v436 = vsel %vm434, %v409, 0
        %438 = vmatprep.subr.bf16.mxu0 0
        %439 = vmatpush1.bf16.msra.mxu0 %v430
        %440 = vmatprep.subr.bf16.mxu0 0
        %441 = vmatpush1.bf16.msra.mxu0 %v431
        %442 = vmatprep.subr.bf16.mxu0 0
        %443 = vmatpush1.bf16.msra.mxu0 0
        %444 = vmatprep.subr.bf16.mxu0 0
        %445 = vmatpush1.bf16.msra.mxu0 0
        %446 = vmatprep.subr.bf16.mxu0 0
        %447 = vmatpush1.bf16.msra.mxu0 0
        %448 = vmatprep.subr.bf16.mxu0 0
        %449 = vmatpush1.bf16.msra.mxu0 0
        %450 = vmatprep.subr.bf16.mxu0 0
        %451 = vmatpush1.bf16.msra.mxu0 0
        %452 = vmatprep.subr.bf16.mxu0 0
        %453 = vmatpush1.bf16.msra.mxu0 0
        %454 = vmatprep.subr.bf16.mxu0 0
        %455 = vmatpush1.bf16.msra.mxu0 0
        %456 = vmatprep.subr.bf16.mxu0 0
        %457 = vmatpush1.bf16.msra.mxu0 0
        %458 = vmatprep.subr.bf16.mxu0 0
        %459 = vmatpush1.bf16.msra.mxu0 0
        %460 = vmatprep.subr.bf16.mxu0 0
        %461 = vmatpush1.bf16.msra.mxu0 0
        %462 = vmatprep.subr.bf16.mxu0 0
        %463 = vmatpush1.bf16.msra.mxu0 0
        %464 = vmatprep.subr.bf16.mxu0 0
        %465 = vmatpush1.bf16.msra.mxu0 0
        %466 = vmatprep.subr.bf16.mxu0 0
        %467 = vmatpush1.bf16.msra.mxu0 0
        %468 = vmatprep.subr.bf16.mxu0 0
        %469 = vmatpush1.bf16.msra.mxu0 0
        %470 = vmatprep.mubr.bf16.mxu0 0
        %471 = vmatmul.mubr.bf16.gmra.mrb[0].mxu0 %v436
        %v472 = vpop.f32.mrb[0].mxu0
        %v473 = vadd.f32 %v420, %v472
        %v474 = vpop.f32.mrb[0].mxu0
        %v475 = vpop.f32.mrb[0].mxu0
        %v476 = vpop.f32.mrb[0].mxu0
        %477 = vdwg.mxu0
        %v478 = vld [vmem:[#allocation8] sm:$0xf]
        %v479 = vld [vmem:[#allocation8 + $0x4] sm:$0xf]
        %v480 = vld [vmem:[#allocation8 + $0x8] sm:$0xf]
        %v481 = vld [vmem:[#allocation8 + $0xc] sm:$0xf]
        %v482 = vld [vmem:[%s5] sm:$0x1]
        %v484 = vlaneseq
        %v485 = vshrl.u32 %v484, 7
        %v486 = vsub.s32 0, %v485
        %v487 = vrot.slane %v482, %v486
        %v493 = vunpack.c.l.b16 %v478
        %v494 = vunpack.c.l.b16 %v479
        %v495 = vunpack.c.l.b16 %v480
        %v496 = vunpack.c.l.b16 %v481
        %v497 = vpack.c.b16 %v494, %v493
        %v498 = vpack.c.b16 %v496, %v495
        %v502 = vsel %vm434, %v410, 0
        %504 = vmatprep.subr.bf16.mxu0 0
        %505 = vmatpush1.bf16.msra.mxu0 %v497
        %506 = vmatprep.subr.bf16.mxu0 0
        %507 = vmatpush1.bf16.msra.mxu0 %v498
        %508 = vmatprep.subr.bf16.mxu0 0
        %509 = vmatpush1.bf16.msra.mxu0 0
        %510 = vmatprep.subr.bf16.mxu0 0
        %511 = vmatpush1.bf16.msra.mxu0 0
        %512 = vmatprep.subr.bf16.mxu0 0
        %513 = vmatpush1.bf16.msra.mxu0 0
        %514 = vmatprep.subr.bf16.mxu0 0
        %515 = vmatpush1.bf16.msra.mxu0 0
        %516 = vmatprep.subr.bf16.mxu0 0
        %517 = vmatpush1.bf16.msra.mxu0 0
        %518 = vmatprep.subr.bf16.mxu0 0
        %519 = vmatpush1.bf16.msra.mxu0 0
        %520 = vmatprep.subr.bf16.mxu0 0
        %521 = vmatpush1.bf16.msra.mxu0 0
        %522 = vmatprep.subr.bf16.mxu0 0
        %523 = vmatpush1.bf16.msra.mxu0 0
        %524 = vmatprep.subr.bf16.mxu0 0
        %525 = vmatpush1.bf16.msra.mxu0 0
        %526 = vmatprep.subr.bf16.mxu0 0
        %527 = vmatpush1.bf16.msra.mxu0 0
        %528 = vmatprep.subr.bf16.mxu0 0
        %529 = vmatpush1.bf16.msra.mxu0 0
        %530 = vmatprep.subr.bf16.mxu0 0
        %531 = vmatpush1.bf16.msra.mxu0 0
        %532 = vmatprep.subr.bf16.mxu0 0
        %533 = vmatpush1.bf16.msra.mxu0 0
        %534 = vmatprep.subr.bf16.mxu0 0
        %535 = vmatpush1.bf16.msra.mxu0 0
        %536 = vmatprep.mubr.bf16.mxu0 0
        %537 = vmatmul.mubr.bf16.gmra.mrb[0].mxu0 %v502
        %v538 = vpop.f32.mrb[0].mxu0
        %v539 = vadd.f32 %v487, %v538
        %v540 = vpop.f32.mrb[0].mxu0
        %v541 = vpop.f32.mrb[0].mxu0
        %v542 = vpop.f32.mrb[0].mxu0
        %543 = vdwg.mxu0
        %545 = vrot.lane.b32.xlu0 %v473, 120
        %v546 = vpop.permute.xlu0 %545
        %548 = vrot.lane.b32.xlu0 %v473, 112
        %v549 = vpop.permute.xlu0 %548
        %551 = vrot.lane.b32.xlu0 %v473, 104
        %v552 = vpop.permute.xlu0 %551
        %v554 = vcombine.low %v473, %v549
        %v555 = vcombine.high %v473, %v549
        %v557 = vunpack.c.l.s4 1983009808
        %v558 = vunpack.c.0.s8 %v557
        %v559 = vlaneseq
        %v560 = vshrl.u32 %v559, 7
        %v561 = vsub.s32 %v558, %v560
        %v562 = vrot.slane %v554, %v561
        %v564 = vunpack.c.l.s4 1983009808
        %v565 = vunpack.c.0.s8 %v564
        %v566 = vlaneseq
        %v567 = vshrl.u32 %v566, 7
        %v568 = vsub.s32 %v565, %v567
        %v569 = vrot.slane %v555, %v568
        %v570 = vcombine.low %v546, %v552
        %v571 = vcombine.high %v546, %v552
        %v573 = vunpack.c.l.s4 1983009808
        %v574 = vunpack.c.0.s8 %v573
        %v575 = vlaneseq
        %v576 = vshrl.u32 %v575, 7
        %v577 = vsub.s32 %v574, %v576
        %v578 = vrot.slane %v570, %v577
        %v580 = vunpack.c.l.s4 1983009808
        %v581 = vunpack.c.0.s8 %v580
        %v582 = vlaneseq
        %v583 = vshrl.u32 %v582, 7
        %v584 = vsub.s32 %v581, %v583
        %v585 = vrot.slane %v571, %v584
        %v586 = vcombine.low %v562, %v578
        %v587 = vcombine.high %v562, %v578
        %v589 = vunpack.c.l.s4 1934713408
        %v590 = vunpack.c.0.s8 %v589
        %v591 = vlaneseq
        %v592 = vshrl.u32 %v591, 7
        %v593 = vsub.s32 %v590, %v592
        %v594 = vrot.slane %v586, %v593
        %v596 = vunpack.c.l.s4 1934713408
        %v597 = vunpack.c.0.s8 %v596
        %v598 = vlaneseq
        %v599 = vshrl.u32 %v598, 7
        %v600 = vsub.s32 %v597, %v599
        %v601 = vrot.slane %v587, %v600
        %v602 = vcombine.low %v569, %v585
        %v603 = vcombine.high %v569, %v585
        %v605 = vunpack.c.l.s4 1934713408
        %v606 = vunpack.c.0.s8 %v605
        %v607 = vlaneseq
        %v608 = vshrl.u32 %v607, 7
        %v609 = vsub.s32 %v606, %v608
        %v610 = vrot.slane %v602, %v609
        %v612 = vunpack.c.l.s4 1934713408
        %v613 = vunpack.c.0.s8 %v612
        %v614 = vlaneseq
        %v615 = vshrl.u32 %v614, 7
        %v616 = vsub.s32 %v613, %v615
        %v617 = vrot.slane %v603, %v616
        %v618 = vcombine.high %v594, 0.0
        %v619 = vcombine.high %v601, 0.0
        %v620 = vcombine.high %v610, 0.0
        %v621 = vcombine.high %v617, 0.0
        %v622 = vcombine.low %v594, %v601
        %v624 = vunpack.c.l.s4 1983009808
        %v625 = vunpack.c.0.s8 %v624
        %v626 = vlaneseq
        %v627 = vshrl.u32 %v626, 7
        %v628 = vsub.s32 %v625, %v627
        %v629 = vrot.slane %v622, %v628
        %v630 = vcombine.low %v618, %v619
        %v632 = vunpack.c.l.s4 1983009808
        %v633 = vunpack.c.0.s8 %v632
        %v634 = vlaneseq
        %v635 = vshrl.u32 %v634, 7
        %v636 = vsub.s32 %v633, %v635
        %v637 = vrot.slane %v630, %v636
        %v638 = vcombine.low %v610, %v617
        %v640 = vunpack.c.l.s4 1983009808
        %v641 = vunpack.c.0.s8 %v640
        %v642 = vlaneseq
        %v643 = vshrl.u32 %v642, 7
        %v644 = vsub.s32 %v641, %v643
        %v645 = vrot.slane %v638, %v644
        %v646 = vcombine.low %v620, %v621
        %v648 = vunpack.c.l.s4 1983009808
        %v649 = vunpack.c.0.s8 %v648
        %v650 = vlaneseq
        %v651 = vshrl.u32 %v650, 7
        %v652 = vsub.s32 %v649, %v651
        %v653 = vrot.slane %v646, %v652
        %v654 = vcombine.low %v629, %v637
        %v655 = vcombine.high %v629, %v637
        %v657 = vunpack.c.l.s4 1934713408
        %v658 = vunpack.c.0.s8 %v657
        %v659 = vlaneseq
        %v660 = vshrl.u32 %v659, 7
        %v661 = vsub.s32 %v658, %v660
        %v662 = vrot.slane %v654, %v661
        %v664 = vunpack.c.l.s4 1934713408
        %v665 = vunpack.c.0.s8 %v664
        %v666 = vlaneseq
        %v667 = vshrl.u32 %v666, 7
        %v668 = vsub.s32 %v665, %v667
        %v669 = vrot.slane %v655, %v668
        %v670 = vcombine.low %v645, %v653
        %v671 = vcombine.high %v645, %v653
        %v673 = vunpack.c.l.s4 1934713408
        %v674 = vunpack.c.0.s8 %v673
        %v675 = vlaneseq
        %v676 = vshrl.u32 %v675, 7
        %v677 = vsub.s32 %v674, %v676
        %v678 = vrot.slane %v670, %v677
        %v680 = vunpack.c.l.s4 1934713408
        %v681 = vunpack.c.0.s8 %v680
        %v682 = vlaneseq
        %v683 = vshrl.u32 %v682, 7
        %v684 = vsub.s32 %v681, %v683
        %v685 = vrot.slane %v671, %v684
        %v686 = vcombine.low %v662, %v678
        %v687 = vcombine.high %v662, %v678
        %v688 = vcombine.low %v669, %v685
        %v689 = vcombine.high %v669, %v685
        %v690 = vpack.c.bf16 %v686, %v686
        %v691 = vpack.c.bf16 %v687, %v687
        %v692 = vpack.c.bf16 %v688, %v688
        %v693 = vpack.c.bf16 %v689, %v689
        %vm694 = vcmask 60416
        %695 = vst.msk [vmem:[%s390] sm:$0xf] %vm694, %v690
        %696 = vst.msk [vmem:[%s390 + $0x4] sm:$0xf] %vm694, %v691
        %697 = vst.msk [vmem:[%s390 + $0x8] sm:$0xf] %vm694, %v692
        %698 = vst.msk [vmem:[%s390 + $0xc] sm:$0xf] %vm694, %v693
        %699 = vrot.lane.b32.xlu0 %v473, 96
        %v700 = vpop.permute.xlu0 %699
        %701 = vrot.lane.b32.xlu0 %v546, 96
        %v702 = vpop.permute.xlu0 %701
        %703 = vrot.lane.b32.xlu0 %v549, 96
        %v704 = vpop.permute.xlu0 %703
        %705 = vrot.lane.b32.xlu0 %v552, 96
        %v706 = vpop.permute.xlu0 %705
        %v711 = vcombine.low %v700, %v704
        %v712 = vcombine.high %v700, %v704
        %v714 = vunpack.c.l.s4 1983009808
        %v715 = vunpack.c.0.s8 %v714
        %v716 = vlaneseq
        %v717 = vshrl.u32 %v716, 7
        %v718 = vsub.s32 %v715, %v717
        %v719 = vrot.slane %v711, %v718
        %v721 = vunpack.c.l.s4 1983009808
        %v722 = vunpack.c.0.s8 %v721
        %v723 = vlaneseq
        %v724 = vshrl.u32 %v723, 7
        %v725 = vsub.s32 %v722, %v724
        %v726 = vrot.slane %v712, %v725
        %v727 = vcombine.low %v702, %v706
        %v728 = vcombine.high %v702, %v706
        %v730 = vunpack.c.l.s4 1983009808
        %v731 = vunpack.c.0.s8 %v730
        %v732 = vlaneseq
        %v733 = vshrl.u32 %v732, 7
        %v734 = vsub.s32 %v731, %v733
        %v735 = vrot.slane %v727, %v734
        %v737 = vunpack.c.l.s4 1983009808
        %v738 = vunpack.c.0.s8 %v737
        %v739 = vlaneseq
        %v740 = vshrl.u32 %v739, 7
        %v741 = vsub.s32 %v738, %v740
        %v742 = vrot.slane %v728, %v741
        %v743 = vcombine.low %v719, %v735
        %v744 = vcombine.high %v719, %v735
        %v746 = vunpack.c.l.s4 1934713408
        %v747 = vunpack.c.0.s8 %v746
        %v748 = vlaneseq
        %v749 = vshrl.u32 %v748, 7
        %v750 = vsub.s32 %v747, %v749
        %v751 = vrot.slane %v743, %v750
        %v753 = vunpack.c.l.s4 1934713408
        %v754 = vunpack.c.0.s8 %v753
        %v755 = vlaneseq
        %v756 = vshrl.u32 %v755, 7
        %v757 = vsub.s32 %v754, %v756
        %v758 = vrot.slane %v744, %v757
        %v759 = vcombine.low %v726, %v742
        %v760 = vcombine.high %v726, %v742
        %v762 = vunpack.c.l.s4 1934713408
        %v763 = vunpack.c.0.s8 %v762
        %v764 = vlaneseq
        %v765 = vshrl.u32 %v764, 7
        %v766 = vsub.s32 %v763, %v765
        %v767 = vrot.slane %v759, %v766
        %v769 = vunpack.c.l.s4 1934713408
        %v770 = vunpack.c.0.s8 %v769
        %v771 = vlaneseq
        %v772 = vshrl.u32 %v771, 7
        %v773 = vsub.s32 %v770, %v772
        %v774 = vrot.slane %v760, %v773
        %v775 = vcombine.high %v751, 0.0
        %v776 = vcombine.high %v758, 0.0
        %v777 = vcombine.high %v767, 0.0
        %v778 = vcombine.high %v774, 0.0
        %v779 = vcombine.low %v751, %v758
        %v781 = vunpack.c.l.s4 1983009808
        %v782 = vunpack.c.0.s8 %v781
        %v783 = vlaneseq
        %v784 = vshrl.u32 %v783, 7
        %v785 = vsub.s32 %v782, %v784
        %v786 = vrot.slane %v779, %v785
        %v787 = vcombine.low %v775, %v776
        %v789 = vunpack.c.l.s4 1983009808
        %v790 = vunpack.c.0.s8 %v789
        %v791 = vlaneseq
        %v792 = vshrl.u32 %v791, 7
        %v793 = vsub.s32 %v790, %v792
        %v794 = vrot.slane %v787, %v793
        %v795 = vcombine.low %v767, %v774
        %v797 = vunpack.c.l.s4 1983009808
        %v798 = vunpack.c.0.s8 %v797
        %v799 = vlaneseq
        %v800 = vshrl.u32 %v799, 7
        %v801 = vsub.s32 %v798, %v800
        %v802 = vrot.slane %v795, %v801
        %v803 = vcombine.low %v777, %v778
        %v805 = vunpack.c.l.s4 1983009808
        %v806 = vunpack.c.0.s8 %v805
        %v807 = vlaneseq
        %v808 = vshrl.u32 %v807, 7
        %v809 = vsub.s32 %v806, %v808
        %v810 = vrot.slane %v803, %v809
        %v811 = vcombine.low %v786, %v794
        %v812 = vcombine.high %v786, %v794
        %v814 = vunpack.c.l.s4 1934713408
        %v815 = vunpack.c.0.s8 %v814
        %v816 = vlaneseq
        %v817 = vshrl.u32 %v816, 7
        %v818 = vsub.s32 %v815, %v817
        %v819 = vrot.slane %v811, %v818
        %v821 = vunpack.c.l.s4 1934713408
        %v822 = vunpack.c.0.s8 %v821
        %v823 = vlaneseq
        %v824 = vshrl.u32 %v823, 7
        %v825 = vsub.s32 %v822, %v824
        %v826 = vrot.slane %v812, %v825
        %v827 = vcombine.low %v802, %v810
        %v828 = vcombine.high %v802, %v810
        %v830 = vunpack.c.l.s4 1934713408
        %v831 = vunpack.c.0.s8 %v830
        %v832 = vlaneseq
        %v833 = vshrl.u32 %v832, 7
        %v834 = vsub.s32 %v831, %v833
        %v835 = vrot.slane %v827, %v834
        %v837 = vunpack.c.l.s4 1934713408
        %v838 = vunpack.c.0.s8 %v837
        %v839 = vlaneseq
        %v840 = vshrl.u32 %v839, 7
        %v841 = vsub.s32 %v838, %v840
        %v842 = vrot.slane %v828, %v841
        %v843 = vcombine.low %v819, %v835
        %v844 = vcombine.high %v819, %v835
        %v845 = vcombine.low %v826, %v842
        %v846 = vcombine.high %v826, %v842
        %v847 = vpack.c.bf16 %v843, %v843
        %v848 = vpack.c.bf16 %v844, %v844
        %v849 = vpack.c.bf16 %v845, %v845
        %v850 = vpack.c.bf16 %v846, %v846
        %851 = vst.msk [vmem:[%s397] sm:$0xf] %vm694, %v847
        %852 = vst.msk [vmem:[%s397 + $0x4] sm:$0xf] %vm694, %v848
        %853 = vst.msk [vmem:[%s397 + $0x8] sm:$0xf] %vm694, %v849
        %854 = vst.msk [vmem:[%s397 + $0xc] sm:$0xf] %vm694, %v850
        %856 = vrot.lane.b32.xlu0 %v539, 120
        %v857 = vpop.permute.xlu0 %856
        %859 = vrot.lane.b32.xlu0 %v539, 112
        %v860 = vpop.permute.xlu0 %859
        %862 = vrot.lane.b32.xlu0 %v539, 104
        %v863 = vpop.permute.xlu0 %862
        %v865 = vcombine.low %v539, %v860
        %v866 = vcombine.high %v539, %v860
        %v868 = vunpack.c.l.s4 1983009808
        %v869 = vunpack.c.0.s8 %v868
        %v870 = vlaneseq
        %v871 = vshrl.u32 %v870, 7
        %v872 = vsub.s32 %v869, %v871
        %v873 = vrot.slane %v865, %v872
        %v875 = vunpack.c.l.s4 1983009808
        %v876 = vunpack.c.0.s8 %v875
        %v877 = vlaneseq
        %v878 = vshrl.u32 %v877, 7
        %v879 = vsub.s32 %v876, %v878
        %v880 = vrot.slane %v866, %v879
        %v881 = vcombine.low %v857, %v863
        %v882 = vcombine.high %v857, %v863
        %v884 = vunpack.c.l.s4 1983009808
        %v885 = vunpack.c.0.s8 %v884
        %v886 = vlaneseq
        %v887 = vshrl.u32 %v886, 7
        %v888 = vsub.s32 %v885, %v887
        %v889 = vrot.slane %v881, %v888
        %v891 = vunpack.c.l.s4 1983009808
        %v892 = vunpack.c.0.s8 %v891
        %v893 = vlaneseq
        %v894 = vshrl.u32 %v893, 7
        %v895 = vsub.s32 %v892, %v894
        %v896 = vrot.slane %v882, %v895
        %v897 = vcombine.low %v873, %v889
        %v898 = vcombine.high %v873, %v889
        %v900 = vunpack.c.l.s4 1934713408
        %v901 = vunpack.c.0.s8 %v900
        %v902 = vlaneseq
        %v903 = vshrl.u32 %v902, 7
        %v904 = vsub.s32 %v901, %v903
        %v905 = vrot.slane %v897, %v904
        %v907 = vunpack.c.l.s4 1934713408
        %v908 = vunpack.c.0.s8 %v907
        %v909 = vlaneseq
        %v910 = vshrl.u32 %v909, 7
        %v911 = vsub.s32 %v908, %v910
        %v912 = vrot.slane %v898, %v911
        %v913 = vcombine.low %v880, %v896
        %v914 = vcombine.high %v880, %v896
        %v916 = vunpack.c.l.s4 1934713408
        %v917 = vunpack.c.0.s8 %v916
        %v918 = vlaneseq
        %v919 = vshrl.u32 %v918, 7
        %v920 = vsub.s32 %v917, %v919
        %v921 = vrot.slane %v913, %v920
        %v923 = vunpack.c.l.s4 1934713408
        %v924 = vunpack.c.0.s8 %v923
        %v925 = vlaneseq
        %v926 = vshrl.u32 %v925, 7
        %v927 = vsub.s32 %v924, %v926
        %v928 = vrot.slane %v914, %v927
        %v929 = vcombine.high %v905, 0.0
        %v930 = vcombine.high %v912, 0.0
        %v931 = vcombine.high %v921, 0.0
        %v932 = vcombine.high %v928, 0.0
        %v933 = vcombine.low %v905, %v912
        %v935 = vunpack.c.l.s4 1983009808
        %v936 = vunpack.c.0.s8 %v935
        %v937 = vlaneseq
        %v938 = vshrl.u32 %v937, 7
        %v939 = vsub.s32 %v936, %v938
        %v940 = vrot.slane %v933, %v939
        %v941 = vcombine.low %v929, %v930
        %v943 = vunpack.c.l.s4 1983009808
        %v944 = vunpack.c.0.s8 %v943
        %v945 = vlaneseq
        %v946 = vshrl.u32 %v945, 7
        %v947 = vsub.s32 %v944, %v946
        %v948 = vrot.slane %v941, %v947
        %v949 = vcombine.low %v921, %v928
        %v951 = vunpack.c.l.s4 1983009808
        %v952 = vunpack.c.0.s8 %v951
        %v953 = vlaneseq
        %v954 = vshrl.u32 %v953, 7
        %v955 = vsub.s32 %v952, %v954
        %v956 = vrot.slane %v949, %v955
        %v957 = vcombine.low %v931, %v932
        %v959 = vunpack.c.l.s4 1983009808
        %v960 = vunpack.c.0.s8 %v959
        %v961 = vlaneseq
        %v962 = vshrl.u32 %v961, 7
        %v963 = vsub.s32 %v960, %v962
        %v964 = vrot.slane %v957, %v963
        %v965 = vcombine.low %v940, %v948
        %v966 = vcombine.high %v940, %v948
        %v968 = vunpack.c.l.s4 1934713408
        %v969 = vunpack.c.0.s8 %v968
        %v970 = vlaneseq
        %v971 = vshrl.u32 %v970, 7
        %v972 = vsub.s32 %v969, %v971
        %v973 = vrot.slane %v965, %v972
        %v975 = vunpack.c.l.s4 1934713408
        %v976 = vunpack.c.0.s8 %v975
        %v977 = vlaneseq
        %v978 = vshrl.u32 %v977, 7
        %v979 = vsub.s32 %v976, %v978
        %v980 = vrot.slane %v966, %v979
        %v981 = vcombine.low %v956, %v964
        %v982 = vcombine.high %v956, %v964
        %v984 = vunpack.c.l.s4 1934713408
        %v985 = vunpack.c.0.s8 %v984
        %v986 = vlaneseq
        %v987 = vshrl.u32 %v986, 7
        %v988 = vsub.s32 %v985, %v987
        %v989 = vrot.slane %v981, %v988
        %v991 = vunpack.c.l.s4 1934713408
        %v992 = vunpack.c.0.s8 %v991
        %v993 = vlaneseq
        %v994 = vshrl.u32 %v993, 7
        %v995 = vsub.s32 %v992, %v994
        %v996 = vrot.slane %v982, %v995
        %v997 = vcombine.low %v973, %v989
        %v998 = vcombine.high %v973, %v989
        %v999 = vcombine.low %v980, %v996
        %v1000 = vcombine.high %v980, %v996
        %v1001 = vpack.c.bf16 %v997, %v997
        %v1002 = vpack.c.bf16 %v998, %v998
        %v1003 = vpack.c.bf16 %v999, %v999
        %v1004 = vpack.c.bf16 %v1000, %v1000
        %1005 = vst.msk [vmem:[%s404] sm:$0xf] %vm694, %v1001
        %1006 = vst.msk [vmem:[%s404 + $0x4] sm:$0xf] %vm694, %v1002
        %1007 = vst.msk [vmem:[%s404 + $0x8] sm:$0xf] %vm694, %v1003
        %1008 = vst.msk [vmem:[%s404 + $0xc] sm:$0xf] %vm694, %v1004
        %s1009 = sand.u32 %s177, 1
        %s1010 = scalar_lea.sflag [#allocation4], %s1009
        %s1011 = sand.u32 %s177, 1
        %s1012 = smul.addr %s1011, 16
        %s1013 = scalar_lea.vmem [#allocation10], %s1012
        %s1014 = sand.u32 %s33, 1
        %s1015 = scalar_lea.sflag [#allocation12], %s1014
        %s1016 = sand.u32 %s203, 1
        %s1017 = smul.addr %s1016, 16
        %s1018 = scalar_lea.vmem [#allocation11], %s1017
        %s1019 = sand.u32 %s33, 1
        %s1020 = scalar_lea.sflag [#allocation12], %s1019
        %s1021 = sand.u32 %s229, 1
        %s1022 = smul.addr %s1021, 16
        %s1023 = scalar_lea.vmem [#allocation13], %s1022
        // Predicated region
        $region61: #{tpu_custom_call.1} parent=43 // pred_check
          %p1024 = pneg %p187
        $region62: #{tpu_custom_call.1} parent=43 // pred_check_branch
          %1026 = sbr.rel (%p1024) target = $region64
        $region63: #{tpu_custom_call.1} parent=43 // pred_region
          %s1028 = ssub.s32 256, 256
          %1029 = vsyncadd %s1010, %s1028
          %s1030 = smul.addr %s33, 4
          %s1031 = smul.addr %s1030, 64
          %s1032 = scalar_lea.hbm %s6, %s1031
          %s1033 = sshll.u32 %s1013, 4
          %s1034 = int_to_ptr.vmem [resolvable:$true] %s1033
          %1039 = dma.vmem_to_hbm [thread:$0]  %s1034, 256, %s1032, %s1010, 64, 64, 4
        $region64: #{tpu_custom_call.1} parent=43 // pred_fallthru
          _
        // Predicated region
        $region65: #{tpu_custom_call.1} parent=43 // pred_check
          %p1040 = pneg %p213
        $region66: #{tpu_custom_call.1} parent=43 // pred_check_branch
          %1042 = sbr.rel (%p1040) target = $region68
        $region67: #{tpu_custom_call.1} parent=43 // pred_region
          %s1044 = ssub.s32 256, 256
          %1045 = vsyncadd %s1015, %s1044
          %s1046 = smul.addr %s33, 4
          %s1047 = smul.addr %s1046, 64
          %s1048 = scalar_lea.hbm %s7, %s1047
          %s1049 = sshll.u32 %s1018, 4
          %s1050 = int_to_ptr.vmem [resolvable:$true] %s1049
          %1055 = dma.vmem_to_hbm [thread:$0]  %s1050, 256, %s1048, %s1015, 64, 64, 4
        $region68: #{tpu_custom_call.1} parent=43 // pred_fallthru
          _
        // Predicated region
        $region69: #{tpu_custom_call.1} parent=43 // pred_check
          %p1056 = pneg %p239
        $region70: #{tpu_custom_call.1} parent=43 // pred_check_branch
          %1058 = sbr.rel (%p1056) target = $region72
        $region71: #{tpu_custom_call.1} parent=43 // pred_region
          %s1060 = ssub.s32 256, 256
          %1061 = vsyncadd %s1020, %s1060
          %s1062 = smul.addr %s33, 4
          %s1063 = smul.addr %s1062, 64
          %s1064 = scalar_lea.hbm %s8, %s1063
          %s1065 = sshll.u32 %s1023, 4
          %s1066 = int_to_ptr.vmem [resolvable:$true] %s1065
          %1071 = dma.vmem_to_hbm [thread:$0]  %s1066, 256, %s1064, %s1020, 64, 64, 4
        $region72: #{tpu_custom_call.1} parent=43 // pred_fallthru
          _
      $region44: #{tpu_custom_call.1} parent=5 // pred_fallthru
        _
      %p1072 = scmp.le.s32.totalorder 2, %s28
      // Predicated region
      $region73: #{tpu_custom_call.1} parent=5 // pred_check
        %p1073 = pneg %p1072
      $region74: #{tpu_custom_call.1} parent=5 // pred_check_branch
        %1075 = sbr.rel (%p1073) target = $region76
      $region75: #{tpu_custom_call.1} parent=5 // pred_region
        %s1076 = ssub.s32 %s28, 2
        // Predicated region
        $region77: #{tpu_custom_call.1} parent=75 // pred_check
          %p1077 = pneg %p193
        $region78: #{tpu_custom_call.1} parent=75 // pred_check_branch
          %1079 = sbr.rel (%p1077) target = $region80
        $region79: #{tpu_custom_call.1} parent=75 // pred_region
          %s1080 = sand.u32 %s178, 1
          %s1081 = scalar_lea.sflag [#allocation4], %s1080
          %s1082 = sand.u32 %s178, 1
          %s1083 = smul.addr %s1082, 16
          %s1084 = scalar_lea.vmem [#allocation10], %s1083
          %1085 = dma.done %s1081, 256
        $region80: #{tpu_custom_call.1} parent=75 // pred_fallthru
          _
        // Predicated region
        $region81: #{tpu_custom_call.1} parent=75 // pred_check
          %p1086 = pneg %p219
        $region82: #{tpu_custom_call.1} parent=75 // pred_check_branch
          %1088 = sbr.rel (%p1086) target = $region84
        $region83: #{tpu_custom_call.1} parent=75 // pred_region
          %s1089 = sand.u32 %s34, 1
          %s1090 = scalar_lea.sflag [#allocation12], %s1089
          %s1091 = sand.u32 %s204, 1
          %s1092 = smul.addr %s1091, 16
          %s1093 = scalar_lea.vmem [#allocation11], %s1092
          %1094 = dma.done %s1090, 256
        $region84: #{tpu_custom_call.1} parent=75 // pred_fallthru
          _
        // Predicated region
        $region85: #{tpu_custom_call.1} parent=75 // pred_check
          %p1095 = pneg %p245
        $region86: #{tpu_custom_call.1} parent=75 // pred_check_branch
          %1097 = sbr.rel (%p1095) target = $region88
        $region87: #{tpu_custom_call.1} parent=75 // pred_region
          %s1098 = sand.u32 %s34, 1
          %s1099 = scalar_lea.sflag [#allocation12], %s1098
          %s1100 = sand.u32 %s230, 1
          %s1101 = smul.addr %s1100, 16
          %s1102 = scalar_lea.vmem [#allocation13], %s1101
          %1103 = dma.done %s1099, 256
        $region88: #{tpu_custom_call.1} parent=75 // pred_fallthru
          _
      $region76: #{tpu_custom_call.1} parent=5 // pred_fallthru
        _
    $region6: #{tpu_custom_call.1} parent=1 // loop_footer
      %s32 = sadd.s32 1, %s28
    $region7: #{tpu_custom_call.1} parent=1 // loop_footer_branch
      %27 = sbr.rel target = $region3
    $region8: #{tpu_custom_call.1} parent=1 // loop_exit
      _
    %1104 = vsyncpa [#allocation3], 1
    %s1105 = scalar_lea.sflag [#allocation3], 1
    %1106 = vsyncpa %s1105, 1
    %1107 = vsyncpa [#allocation6], 1
    %s1108 = scalar_lea.sflag [#allocation6], 1
    %1109 = vsyncpa %s1108, 1
    %1110 = vsyncpa [#allocation9], 1
    %1111 = vsyncpa [#allocation4], 1
    %s1112 = scalar_lea.sflag [#allocation4], 1
    %1113 = vsyncpa %s1112, 1
    %1114 = vsyncpa [#allocation12], 1
    %s1115 = scalar_lea.sflag [#allocation12], 1
    %1116 = vsyncpa %s1115, 1

</llo_original>
